<compile_context>
chip_gen: v7x
topology: tpu7x:2x2x1
jax: 0.10.0
libtpu: 0.0.40
codegen_flags: <defaults>
</compile_context>

<pallas_src>
import jax
import jax.numpy as jnp
from jax.experimental import pallas as pl
from jax.experimental.pallas import tpu as pltpu


def _round_up(v, m):
    return ((v + m - 1) // m) * m


def _linear_kernel_single_k(x_ref, w_ref, b_ref, o_ref):
    # Whole reduction dim fits in one tile: one MXU pass, fused bias add.
    o_ref[...] = (
        jnp.dot(x_ref[...], w_ref[...], preferred_element_type=jnp.float32)
        + b_ref[...]
    ).astype(o_ref.dtype)


def _linear_kernel_multi_k(x_ref, w_ref, b_ref, o_ref, acc_ref):
    # grid = (row tile i, col tile j, reduction tile k); K is innermost.
    k = pl.program_id(2)

    @pl.when(k == 0)
    def _():
        # Fold the bias into the accumulator init (saves a finalize add pass).
        acc_ref[...] = jnp.broadcast_to(
            b_ref[...], acc_ref.shape).astype(jnp.float32)

    # bf16 x bf16 -> f32 accumulation on the MXU.
    acc_ref[...] += jnp.dot(
        x_ref[...], w_ref[...], preferred_element_type=jnp.float32)

    @pl.when(k == pl.num_programs(2) - 1)
    def _():
        o_ref[...] = acc_ref[...].astype(o_ref.dtype)


def extractor_forward(x, weight, bias, *, tm=None, tn=None, tk=None,
                      compute_dtype=jnp.bfloat16):
    """y = x @ weight.T + bias, matching nn.Linear(E, H).

    x:      (B, E)
    weight: (H, E)   -- torch layout
    bias:   (H,)
    """
    B, E = x.shape
    H, E2 = weight.shape
    assert E == E2 and bias.shape == (H,)
    out_dtype = x.dtype

    # ---- tile selection (lane-dense, VMEM-friendly on v5e/v6e/v7x) ----------
    E_pad = _round_up(E, 128)
    H_pad = _round_up(H, 128)

    if tm is None:
        tm = min(512, _round_up(B, 8))
    tm = _round_up(min(tm, _round_up(B, 8)), 8)
    B_pad = _round_up(B, tm)

    if tk is None:
        tk = min(512, E_pad)
    tk = _round_up(min(tk, E_pad), 128)
    E_pad = _round_up(E_pad, tk)

    if tn is None:
        tn = min(512, H_pad)            # wide tiles => lane-dense unmasked vst
    tn = _round_up(min(tn, H_pad), 128)
    H_pad = _round_up(H_pad, tn)

    # ---- wrapper-side layout: bf16 inputs, zero-padded to tile multiples ----
    x_p = jnp.pad(x.astype(compute_dtype), ((0, B_pad - B), (0, E_pad - E)))
    w_p = jnp.pad(weight.T.astype(compute_dtype),
                  ((0, E_pad - E), (0, H_pad - H)))
    b_p = jnp.pad(bias.astype(jnp.float32), (0, H_pad - H))[None, :]

    n_k = E_pad // tk
    out_bytes = jnp.dtype(out_dtype).itemsize
    in_bytes = jnp.dtype(compute_dtype).itemsize
    cost = pl.CostEstimate(
        flops=2 * B_pad * E_pad * H_pad,
        transcendentals=0,
        bytes_accessed=(x_p.size * in_bytes + w_p.size * in_bytes
                        + b_p.size * 4 + B_pad * H_pad * out_bytes),
    )

    if n_k == 1:
        # Single reduction tile: no accumulator scratch, no K grid axis.
        grid = (B_pad // tm, H_pad // tn)
        grid_spec = pltpu.PrefetchScalarGridSpec(
            num_scalar_prefetch=0,
            grid=grid,
            in_specs=[
                pl.BlockSpec((tm, tk), lambda i, j: (i, 0)),   # x row tile
                pl.BlockSpec((tk, tn), lambda i, j: (0, j)),   # weight tile
                pl.BlockSpec((1, tn), lambda i, j: (0, j)),    # bias (f32)
            ],
            out_specs=pl.BlockSpec((tm, tn), lambda i, j: (i, j)),
        )
        kernel = _linear_kernel_single_k
        dim_sem = ("parallel", "parallel")
    else:
        grid = (B_pad // tm, H_pad // tn, n_k)
        grid_spec = pltpu.PrefetchScalarGridSpec(
            num_scalar_prefetch=0,
            grid=grid,
            in_specs=[
                pl.BlockSpec((tm, tk), lambda i, j, k: (i, k)),  # x row tile
                pl.BlockSpec((tk, tn), lambda i, j, k: (k, j)),  # weight tile
                pl.BlockSpec((1, tn), lambda i, j, k: (0, j)),   # bias (f32)
            ],
            out_specs=pl.BlockSpec((tm, tn), lambda i, j, k: (i, j)),
            scratch_shapes=[pltpu.VMEM((tm, tn), jnp.float32)],
        )
        kernel = _linear_kernel_multi_k
        dim_sem = ("parallel", "parallel", "arbitrary")

    y_pad = pl.pallas_call(
        kernel,
        out_shape=jax.ShapeDtypeStruct((B_pad, H_pad), out_dtype),
        grid_spec=grid_spec,
        compiler_params=pltpu.CompilerParams(
            dimension_semantics=dim_sem,
            vmem_limit_bytes=32 * 1024 * 1024,
        ),
        cost_estimate=cost,
    )(x_p, w_p, b_p)

    return y_pad[:B, :H]


if __name__ == "__main__":
    # Small shapes consistent with the module's forward: (batch, embedding)
    batch = 8
    embedding_size = 32
    hidden_size = 32

    key = jax.random.PRNGKey(0)
    kx, kw, kb = jax.random.split(key, 3)

    # Deterministic synthetic parameters (mimic torch.nn.Linear default init:
    # uniform(-1/sqrt(fan_in), 1/sqrt(fan_in))).
    bound = 1.0 / (embedding_size ** 0.5)
    w_torch = jax.random.uniform(
        kw, (hidden_size, embedding_size), jnp.float32, -bound, bound)
    b_torch = jax.random.uniform(
        kb, (hidden_size,), jnp.float32, -bound, bound)

    x = jax.random.normal(kx, (batch, embedding_size), jnp.float32)

    y = extractor_forward(x, w_torch, b_torch)
    jax.block_until_ready(y)
    assert y.shape == (batch, hidden_size)

    # bf16-consistent reference (kernel uses bf16 inputs, f32 accumulation).
    x_bf = x.astype(jnp.bfloat16).astype(jnp.float32)
    w_bf = w_torch.astype(jnp.bfloat16).astype(jnp.float32)
    y_ref_bf16 = x_bf @ w_bf.T + b_torch
    assert jnp.allclose(y, y_ref_bf16, atol=1e-3, rtol=1e-3)

    # Loose check against the pure-f32 reference (bf16 input rounding only).
    y_ref_f32 = x @ w_torch.T + b_torch
    assert jnp.allclose(y, y_ref_f32, atol=5e-2, rtol=5e-2)

    # Also exercise the multi-K (accumulator) path with a larger synthetic
    # problem to make sure both kernel variants run on-device.
    kx2, kw2, kb2 = jax.random.split(jax.random.PRNGKey(1), 3)
    B2, E2_, H2 = 64, 1024, 640
    x2 = jax.random.normal(kx2, (B2, E2_), jnp.float32)
    w2 = jax.random.normal(kw2, (H2, E2_), jnp.float32) * 0.02
    b2 = jax.random.normal(kb2, (H2,), jnp.float32) * 0.02
    y2 = extractor_forward(x2, w2, b2, tk=256)
    jax.block_until_ready(y2)
    y2_ref = (x2.astype(jnp.bfloat16).astype(jnp.float32)
              @ w2.astype(jnp.bfloat16).astype(jnp.float32).T + b2)
    assert jnp.allclose(y2, y2_ref, atol=2e-2, rtol=2e-2)

    print("KERNEL_OK")
</pallas_src>

<mosaic_0001>
module attributes {stable_mosaic.version = 11 : i64} {
  func.func @_linear_kernel_single_k(%arg0: i32, %arg1: i32, %arg2: memref<8x128xbf16, #tpu.memory_space<vmem>>, %arg3: memref<128x128xbf16, #tpu.memory_space<vmem>>, %arg4: memref<1x128xf32, #tpu.memory_space<vmem>>, %arg5: memref<8x128xf32, #tpu.memory_space<vmem>>) attributes {dimension_semantics = [#tpu.dimension_semantics<parallel>, #tpu.dimension_semantics<parallel>], iteration_bounds = array<i64: 1, 1>, scalar_prefetch = 0 : i64, scratch_operands = 0 : i64, tpu.core_type = #tpu.core_type<tc>, window_params = [{transform_indices = @transform_0, window_bounds = array<i64: 8, 128>}, {transform_indices = @transform_1, window_bounds = array<i64: 128, 128>}, {transform_indices = @transform_2, window_bounds = array<i64: 1, 128>}, {transform_indices = @transform_3, window_bounds = array<i64: 8, 128>}]} {
    %c0 = arith.constant 0 : index
    %c0_0 = arith.constant 0 : index
    %0 = vector.load %arg2[%c0, %c0_0] : memref<8x128xbf16, #tpu.memory_space<vmem>>, vector<8x128xbf16>
    %c0_1 = arith.constant 0 : index
    %c0_2 = arith.constant 0 : index
    %1 = vector.load %arg3[%c0_1, %c0_2] : memref<128x128xbf16, #tpu.memory_space<vmem>>, vector<128x128xbf16>
    %cst = arith.constant dense<0.000000e+00> : vector<8x128xf32>
    %2 = tpu.matmul %0, %1, %cst {dimension_numbers = #tpu.dot_dimension_numbers<[1], [0], [0], [1], [0, 0, 1, 1], [], []>} : vector<8x128xbf16>, vector<128x128xbf16>, vector<8x128xf32> -> vector<8x128xf32>
    %c0_3 = arith.constant 0 : index
    %c0_4 = arith.constant 0 : index
    %3 = vector.load %arg4[%c0_3, %c0_4] : memref<1x128xf32, #tpu.memory_space<vmem>>, vector<1x128xf32>
    %4 = vector.broadcast %3 : vector<1x128xf32> to vector<8x128xf32>
    %5 = arith.addf %2, %4 : vector<8x128xf32>
    %c0_5 = arith.constant 0 : index
    %c0_6 = arith.constant 0 : index
    %6 = vector.load %arg5[%c0_5, %c0_6] : memref<8x128xf32, #tpu.memory_space<vmem>>, vector<8x128xf32>
    tpu.vector_store %arg5[%c0_5, %c0_6], %5 {strides = array<i32>} : memref<8x128xf32, #tpu.memory_space<vmem>>, vector<8x128xf32>,
    return
  }
  func.func @transform_0(%arg0: i32, %arg1: i32) -> (i32, i32) {
    %c0_i32 = arith.constant 0 : i32
    %c0_i32_0 = arith.constant 0 : i32
    return %arg0, %c0_i32 : i32, i32
  }
  func.func @transform_1(%arg0: i32, %arg1: i32) -> (i32, i32) {
    %c0_i32 = arith.constant 0 : i32
    %c0_i32_0 = arith.constant 0 : i32
    return %c0_i32, %arg1 : i32, i32
  }
  func.func @transform_2(%arg0: i32, %arg1: i32) -> (i32, i32) {
    %c0_i32 = arith.constant 0 : i32
    %c0_i32_0 = arith.constant 0 : i32
    return %c0_i32, %arg1 : i32, i32
  }
  func.func @transform_3(%arg0: i32, %arg1: i32) -> (i32, i32) {
    %c0_i32 = arith.constant 0 : i32
    return %arg0, %arg1 : i32, i32
  }
}

</mosaic_0001>

<llo_original>
// kernel: tpu_custom_call.1
$region0: #{tpu_custom_call.1}
  #allocation0 [shape = 'u32[]', space=smem, size = 0x4, offset = 0x4, fixed_abs, tag = 'smem constant byte address 0x4 - core index']
  #allocation1 [shape = 'u32[144,128]{1,0:T(1,128)}', space=vmem, size = 0x12000, scoped, tag = 'internal scratch']
  %s0 = inlined_call_operand.hbm [shape: bf16[8,128], index: 0, kind: input, shape index: {}]
  %s1 = inlined_call_operand.hbm [shape: bf16[128,128], index: 1, kind: input, shape index: {}]
  %s2 = inlined_call_operand.vmem [shape: f32[1,128], index: 2, kind: input, shape index: {}]
  %s3 = inlined_call_operand.hbm [shape: f32[8,128], index: 3, kind: output, shape index: {}]
  %s4 = sld [smem:[#allocation0]]
  $region30: #{tpu_custom_call.1} parent=0
    _
  %s6 = ssub.s32 1, %s4
  %s7 = scalar_select 0, %s6, %s4
  $region1: #{tpu_custom_call.1} parent=0
    #allocation2 [shape = 'u8[2048]{0}', space=vmem, size = 0x800, scoped, tag = 'input window, operand 0, single buffered']
    #allocation3 [shape = 's32[1]{0}', space=sflag, size = 0x4, scoped, tag = 'scoped memory for tpu_custom_call.1']
    #allocation4 [shape = 's32[1]{0}', space=sflag, size = 0x4, scoped, tag = 'scoped memory for tpu_custom_call.1']
    #allocation5 [shape = 'u8[32768]{0}', space=vmem, size = 0x8000, scoped, tag = 'input window, operand 1, single buffered']
    #allocation6 [shape = 's32[1]{0}', space=sflag, size = 0x4, scoped, tag = 'scoped memory for tpu_custom_call.1']
    #allocation7 [shape = 'u8[4096]{0}', space=vmem, size = 0x1000, scoped, tag = 'output window, operand 0, single buffered']
    %8 = vsyncpa [#allocation3], 0
    %9 = vsyncpa [#allocation6], 0
    %10 = vsyncpa [#allocation4], 0
    // Predicated region
    $region2: #{tpu_custom_call.1} parent=1 // pred_check
      _
    $region3: #{tpu_custom_call.1} parent=1 // pred_check_branch
      %12 = sbr.rel (0) target = $region5
    $region4: #{tpu_custom_call.1} parent=1 // pred_region
      %s14 = ssub.s32 64, 64
      %15 = vsyncadd [#allocation3], %s14
      %s17 = sshll.u32 [#allocation2], 4
      %s18 = int_to_ptr.vmem [resolvable:$true] %s17
      %20 = dma.hbm_to_vmem [thread:$0]  %s0, 64, %s18, [#allocation3]
    $region5: #{tpu_custom_call.1} parent=1 // pred_fallthru
      _
    // Predicated region
    $region6: #{tpu_custom_call.1} parent=1 // pred_check
      _
    $region7: #{tpu_custom_call.1} parent=1 // pred_check_branch
      %22 = sbr.rel (0) target = $region9
    $region8: #{tpu_custom_call.1} parent=1 // pred_region
      %s24 = ssub.s32 1024, 1024
      %25 = vsyncadd [#allocation6], %s24
      %s26 = sshll.u32 [#allocation5], 4
      %s27 = int_to_ptr.vmem [resolvable:$true] %s26
      %32 = dma.hbm_to_vmem [thread:$0]  %s1, 1024, %s27, [#allocation6], 64, 64, 4
    $region9: #{tpu_custom_call.1} parent=1 // pred_fallthru
      _
    // Predicated region
    $region10: #{tpu_custom_call.1} parent=1 // pred_check
      _
    $region11: #{tpu_custom_call.1} parent=1 // pred_check_branch
      %34 = sbr.rel (0) target = $region13
    $region12: #{tpu_custom_call.1} parent=1 // pred_region
      _
    $region13: #{tpu_custom_call.1} parent=1 // pred_fallthru
      _
    // Predicated region
    $region14: #{tpu_custom_call.1} parent=1 // pred_check
      _
    $region15: #{tpu_custom_call.1} parent=1 // pred_check_branch
      %36 = sbr.rel (0) target = $region17
    $region16: #{tpu_custom_call.1} parent=1 // pred_region
      %37 = dma.done [#allocation3], 64
    $region17: #{tpu_custom_call.1} parent=1 // pred_fallthru
      _
    // Predicated region
    $region18: #{tpu_custom_call.1} parent=1 // pred_check
      _
    $region19: #{tpu_custom_call.1} parent=1 // pred_check_branch
      %39 = sbr.rel (0) target = $region21
    $region20: #{tpu_custom_call.1} parent=1 // pred_region
      %40 = dma.done [#allocation6], 1024
    $region21: #{tpu_custom_call.1} parent=1 // pred_fallthru
      _
    %v42 = vld [vmem:[#allocation2] sm:$0xf]
    %v43 = vld [vmem:[#allocation5] sm:$0xf]
    %v44 = vld [vmem:[#allocation5 + $0x4] sm:$0xf]
    %v45 = vld [vmem:[#allocation5 + $0x8] sm:$0xf]
    %v46 = vld [vmem:[#allocation5 + $0xc] sm:$0xf]
    %v47 = vld [vmem:[#allocation5 + $0x10] sm:$0xf]
    %v48 = vld [vmem:[#allocation5 + $0x14] sm:$0xf]
    %v49 = vld [vmem:[#allocation5 + $0x18] sm:$0xf]
    %v50 = vld [vmem:[#allocation5 + $0x1c] sm:$0xf]
    %v51 = vld [vmem:[#allocation5 + $0x20] sm:$0xf]
    %v52 = vld [vmem:[#allocation5 + $0x24] sm:$0xf]
    %v53 = vld [vmem:[#allocation5 + $0x28] sm:$0xf]
    %v54 = vld [vmem:[#allocation5 + $0x2c] sm:$0xf]
    %v55 = vld [vmem:[#allocation5 + $0x30] sm:$0xf]
    %v56 = vld [vmem:[#allocation5 + $0x34] sm:$0xf]
    %v57 = vld [vmem:[#allocation5 + $0x38] sm:$0xf]
    %v58 = vld [vmem:[#allocation5 + $0x3c] sm:$0xf]
    %v59 = vld [vmem:[%s2] sm:$0x1]
    %v61 = vlaneseq
    %v62 = vshrl.u32 %v61, 7
    %v63 = vsub.s32 0, %v62
    %v64 = vrot.slane %v59, %v63
    %v82 = vunpack.c.l.b16 %v43
    %v83 = vunpack.c.l.b16 %v44
    %v84 = vunpack.c.l.b16 %v45
    %v85 = vunpack.c.l.b16 %v46
    %v86 = vunpack.c.l.b16 %v47
    %v87 = vunpack.c.l.b16 %v48
    %v88 = vunpack.c.l.b16 %v49
    %v89 = vunpack.c.l.b16 %v50
    %v90 = vunpack.c.l.b16 %v51
    %v91 = vunpack.c.l.b16 %v52
    %v92 = vunpack.c.l.b16 %v53
    %v93 = vunpack.c.l.b16 %v54
    %v94 = vunpack.c.l.b16 %v55
    %v95 = vunpack.c.l.b16 %v56
    %v96 = vunpack.c.l.b16 %v57
    %v97 = vunpack.c.l.b16 %v58
    %v98 = vpack.c.b16 %v83, %v82
    %v99 = vpack.c.b16 %v85, %v84
    %v100 = vpack.c.b16 %v87, %v86
    %v101 = vpack.c.b16 %v89, %v88
    %v102 = vpack.c.b16 %v91, %v90
    %v103 = vpack.c.b16 %v93, %v92
    %v104 = vpack.c.b16 %v95, %v94
    %v105 = vpack.c.b16 %v97, %v96
    %114 = vmatprep.subr.bf16.mxu0 0
    %115 = vmatpush1.bf16.msra.mxu0 %v98
    %116 = vmatprep.subr.bf16.mxu0 0
    %117 = vmatpush1.bf16.msra.mxu0 %v99
    %118 = vmatprep.subr.bf16.mxu0 0
    %119 = vmatpush1.bf16.msra.mxu0 %v100
    %120 = vmatprep.subr.bf16.mxu0 0
    %121 = vmatpush1.bf16.msra.mxu0 %v101
    %122 = vmatprep.subr.bf16.mxu0 0
    %123 = vmatpush1.bf16.msra.mxu0 %v102
    %124 = vmatprep.subr.bf16.mxu0 0
    %125 = vmatpush1.bf16.msra.mxu0 %v103
    %126 = vmatprep.subr.bf16.mxu0 0
    %127 = vmatpush1.bf16.msra.mxu0 %v104
    %128 = vmatprep.subr.bf16.mxu0 0
    %129 = vmatpush1.bf16.msra.mxu0 %v105
    %130 = vmatprep.subr.bf16.mxu0 0
    %131 = vmatpush1.bf16.msra.mxu0 0
    %132 = vmatprep.subr.bf16.mxu0 0
    %133 = vmatpush1.bf16.msra.mxu0 0
    %134 = vmatprep.subr.bf16.mxu0 0
    %135 = vmatpush1.bf16.msra.mxu0 0
    %136 = vmatprep.subr.bf16.mxu0 0
    %137 = vmatpush1.bf16.msra.mxu0 0
    %138 = vmatprep.subr.bf16.mxu0 0
    %139 = vmatpush1.bf16.msra.mxu0 0
    %140 = vmatprep.subr.bf16.mxu0 0
    %141 = vmatpush1.bf16.msra.mxu0 0
    %142 = vmatprep.subr.bf16.mxu0 0
    %143 = vmatpush1.bf16.msra.mxu0 0
    %144 = vmatprep.subr.bf16.mxu0 0
    %145 = vmatpush1.bf16.msra.mxu0 0
    %146 = vmatprep.mubr.bf16.mxu0 0
    %147 = vmatmul.mubr.bf16.gmra.mrb[0].mxu0 %v42
    %v148 = vpop.f32.mrb[0].mxu0
    %v149 = vadd.f32 %v64, %v148
    %v150 = vpop.f32.mrb[0].mxu0
    %v151 = vpop.f32.mrb[0].mxu0
    %v152 = vpop.f32.mrb[0].mxu0
    %153 = vdwg.mxu0
    %154 = vst [vmem:[#allocation7] sm:$0xff] %v149
    // Predicated region
    $region22: #{tpu_custom_call.1} parent=1 // pred_check
      _
    $region23: #{tpu_custom_call.1} parent=1 // pred_check_branch
      %156 = sbr.rel (0) target = $region25
    $region24: #{tpu_custom_call.1} parent=1 // pred_region
      %s158 = ssub.s32 128, 128
      %159 = vsyncadd [#allocation4], %s158
      %s161 = sshll.u32 [#allocation7], 4
      %s162 = int_to_ptr.vmem [resolvable:$true] %s161
      %164 = dma.vmem_to_hbm [thread:$0]  %s162, 128, %s3, [#allocation4]
    $region25: #{tpu_custom_call.1} parent=1 // pred_fallthru
      _
    // Predicated region
    $region26: #{tpu_custom_call.1} parent=1 // pred_check
      _
    $region27: #{tpu_custom_call.1} parent=1 // pred_check_branch
      %166 = sbr.rel (0) target = $region29
    $region28: #{tpu_custom_call.1} parent=1 // pred_region
      %167 = dma.done [#allocation4], 128
    $region29: #{tpu_custom_call.1} parent=1 // pred_fallthru
      _
    %168 = vsyncpa [#allocation3], 1
    %169 = vsyncpa [#allocation6], 1
    %170 = vsyncpa [#allocation4], 1

</llo_original>
